<compile_context>
chip_gen: v7x
topology: tpu7x:2x2x1
jax: 0.10.0
libtpu: 0.0.40
codegen_flags: <defaults>
</compile_context>

<pallas_src>
import functools

import jax
import jax.numpy as jnp
from jax import lax
from jax.experimental import pallas as pl
from jax.experimental.pallas import tpu as pltpu

LANE_W = 128  # lane-dense hidden / fused-head / output width


def _actor_critic_kernel(
    x_ref,
    w1_ref, b1_ref,
    w2_ref, b2_ref,
    w3_ref, b3_ref,
    wh_ref, bh_ref,          # fused (128, 128) head: [actor | critic | zero pad]
    out_ref,                 # (B_pad, 128) lane-dense output
    *, valid_b, out_size,
):
    x = x_ref[...]  # [B_pad, D_in] f32 (rows >= valid_b are zero padding)

    # --- trunk MLP: 3 lane-dense matmuls + ReLU (padded lanes stay exactly 0) ---
    h = jnp.maximum(
        jnp.dot(x, w1_ref[...], preferred_element_type=jnp.float32) + b1_ref[...], 0.0)
    h = jnp.maximum(
        jnp.dot(h, w2_ref[...], preferred_element_type=jnp.float32) + b2_ref[...], 0.0)
    h = jnp.maximum(
        jnp.dot(h, w3_ref[...], preferred_element_type=jnp.float32) + b3_ref[...], 0.0)

    # --- fused actor+critic head: one MXU push for both ---
    head = jnp.dot(h, wh_ref[...], preferred_element_type=jnp.float32) + bh_ref[...]
    b_pad, w = head.shape

    lane = lax.broadcasted_iota(jnp.int32, (b_pad, w), 1)

    # --- softmax over dim=0 (batch axis); mask padded rows only if they exist ---
    if valid_b != b_pad:
        row = lax.broadcasted_iota(jnp.int32, (b_pad, w), 0)
        logits = jnp.where(row < valid_b, head, -jnp.inf)
    else:
        logits = head
    m = jnp.max(logits, axis=0, keepdims=True)
    e = jnp.exp(logits - m)                      # padded rows -> exp(-inf) = 0
    denom = jnp.sum(e, axis=0, keepdims=True)
    probs = e / denom                            # exact divide: matches jax.nn.softmax

    # lanes [0, out_size): actor probs; lane out_size: critic; rest: zero.
    out = jnp.where(lane < out_size, probs,
                    jnp.where(lane == out_size, head, 0.0))
    out_ref[...] = out  # single unmasked, lane-dense store


def prepare_params(params):
    """One-time param prep (run at init, NOT per forward call).

    Zero-pads the 64-wide layers to 128 lanes and fuses actor+critic into one
    (128, 128) head. Padded lanes/rows are exact zeros, so the math is unchanged.
    """
    d_in = params["w1"].shape[0]
    out_size = params["wa"].shape[1]
    assert out_size + 1 <= LANE_W

    w1p = jnp.zeros((d_in, LANE_W), jnp.float32).at[:, :64].set(params["w1"])
    b1p = jnp.zeros((1, LANE_W), jnp.float32).at[:, :64].set(params["b1"])
    w2p = jnp.zeros((LANE_W, LANE_W), jnp.float32).at[:64, :].set(params["w2"])
    b2p = params["b2"].astype(jnp.float32)                        # already (1, 128)
    w3p = jnp.zeros((LANE_W, LANE_W), jnp.float32).at[:, :64].set(params["w3"])
    b3p = jnp.zeros((1, LANE_W), jnp.float32).at[:, :64].set(params["b3"])

    whp = jnp.zeros((LANE_W, LANE_W), jnp.float32)
    whp = whp.at[:64, :out_size].set(params["wa"])
    whp = whp.at[:64, out_size:out_size + 1].set(params["wc"])
    bhp = jnp.zeros((1, LANE_W), jnp.float32)
    bhp = bhp.at[:, :out_size].set(params["ba"])
    bhp = bhp.at[:, out_size:out_size + 1].set(params["bc"])

    prepped = dict(w1=w1p, b1=b1p, w2=w2p, b2=b2p, w3=w3p, b3=b3p, wh=whp, bh=bhp)
    return jax.tree.map(jax.block_until_ready, prepped)


@functools.partial(jax.jit, static_argnames=("out_size",))
def actor_critic_forward(x, prepped, *, out_size):
    """x: [B, input_size] f32. prepped: output of prepare_params.

    Everything (batch padding, kernel, output slicing) fuses into one dispatch.
    """
    B, d_in = x.shape

    # Pad batch up to a multiple of 8 so the sublane axis is full.
    B_pad = max(8, ((B + 7) // 8) * 8)
    if B_pad != B:
        x_pad = jnp.zeros((B_pad, d_in), jnp.float32).at[:B].set(x)
    else:
        x_pad = x

    vmem = pl.BlockSpec(memory_space=pltpu.MemorySpace.VMEM)
    args = (
        x_pad,
        prepped["w1"], prepped["b1"],
        prepped["w2"], prepped["b2"],
        prepped["w3"], prepped["b3"],
        prepped["wh"], prepped["bh"],
    )

    flops = 2 * B_pad * (d_in * LANE_W + 3 * LANE_W * LANE_W)
    bytes_accessed = 4 * (sum(int(a.size) for a in args) + B_pad * LANE_W)

    kernel = functools.partial(_actor_critic_kernel, valid_b=B, out_size=out_size)

    out = pl.pallas_call(
        kernel,
        out_shape=jax.ShapeDtypeStruct((B_pad, LANE_W), jnp.float32),
        in_specs=[vmem] * len(args),
        out_specs=vmem,
        cost_estimate=pl.CostEstimate(
            flops=flops,
            transcendentals=B_pad * LANE_W,
            bytes_accessed=bytes_accessed),
    )(*args)

    actor = out[:B, :out_size]
    critic = out[:B, out_size:out_size + 1]
    return actor, critic


def init_params(key, input_size, output_size):
    """PyTorch-Linear-like uniform(-1/sqrt(fan_in), 1/sqrt(fan_in)) init.

    Weights stored as (in_features, out_features); biases as (1, out_features).
    """
    dims = [(input_size, 64), (64, 128), (128, 64)]
    names = ["1", "2", "3"]
    params = {}
    keys = jax.random.split(key, 2 * (len(dims) + 2))
    ki = 0
    for name, (fin, fout) in zip(names, dims):
        bound = 1.0 / jnp.sqrt(fin)
        params[f"w{name}"] = jax.random.uniform(
            keys[ki], (fin, fout), jnp.float32, -bound, bound); ki += 1
        params[f"b{name}"] = jax.random.uniform(
            keys[ki], (1, fout), jnp.float32, -bound, bound); ki += 1
    bound = 1.0 / jnp.sqrt(64.0)
    params["wa"] = jax.random.uniform(keys[ki], (64, output_size), jnp.float32, -bound, bound); ki += 1
    params["ba"] = jax.random.uniform(keys[ki], (1, output_size), jnp.float32, -bound, bound); ki += 1
    params["wc"] = jax.random.uniform(keys[ki], (64, 1), jnp.float32, -bound, bound); ki += 1
    params["bc"] = jax.random.uniform(keys[ki], (1, 1), jnp.float32, -bound, bound); ki += 1
    return params


def reference_forward(x, params):
    """Pure-JAX reference mirroring the PyTorch forward exactly."""
    h = jnp.maximum(x @ params["w1"] + params["b1"], 0.0)
    h = jnp.maximum(h @ params["w2"] + params["b2"], 0.0)
    h = jnp.maximum(h @ params["w3"] + params["b3"], 0.0)
    logits = h @ params["wa"] + params["ba"]
    actor = jax.nn.softmax(logits, axis=0)          # dim=0, as in the PyTorch code
    critic = h @ params["wc"] + params["bc"]
    return actor, critic


if __name__ == "__main__":
    INPUT_SIZE = 16
    OUTPUT_SIZE = 4
    BATCH = 2

    key = jax.random.PRNGKey(0)
    k_param, k_x = jax.random.split(key)

    params = init_params(k_param, INPUT_SIZE, OUTPUT_SIZE)
    prepped = prepare_params(params)          # one-time, outside the hot path
    x = jax.random.normal(k_x, (BATCH, INPUT_SIZE), jnp.float32)

    actor, critic = actor_critic_forward(x, prepped, out_size=OUTPUT_SIZE)
    jax.block_until_ready((actor, critic))

    # correctness check against pure-JAX reference
    ref_actor, ref_critic = reference_forward(x, params)
    assert actor.shape == (BATCH, OUTPUT_SIZE)
    assert critic.shape == (BATCH, 1)
    assert jnp.allclose(actor, ref_actor, atol=1e-5, rtol=1e-5)
    assert jnp.allclose(critic, ref_critic, atol=1e-5, rtol=1e-5)

    print("KERNEL_OK")
</pallas_src>

<mosaic_0001>
module attributes {stable_mosaic.version = 11 : i64} {
  func.func @_actor_critic_kernel(%arg0: memref<8x16xf32, #tpu.memory_space<vmem>>, %arg1: memref<16x128xf32, #tpu.memory_space<vmem>>, %arg2: memref<1x128xf32, #tpu.memory_space<vmem>>, %arg3: memref<128x128xf32, #tpu.memory_space<vmem>>, %arg4: memref<1x128xf32, #tpu.memory_space<vmem>>, %arg5: memref<128x128xf32, #tpu.memory_space<vmem>>, %arg6: memref<1x128xf32, #tpu.memory_space<vmem>>, %arg7: memref<128x128xf32, #tpu.memory_space<vmem>>, %arg8: memref<1x128xf32, #tpu.memory_space<vmem>>, %arg9: memref<8x128xf32, #tpu.memory_space<vmem>>) attributes {dimension_semantics = [], scalar_prefetch = 0 : i64, scratch_operands = 0 : i64, tpu.core_type = #tpu.core_type<tc>} {
    %c0 = arith.constant 0 : index
    %c0_0 = arith.constant 0 : index
    %0 = vector.load %arg0[%c0, %c0_0] : memref<8x16xf32, #tpu.memory_space<vmem>>, vector<8x16xf32>
    %c0_1 = arith.constant 0 : index
    %c0_2 = arith.constant 0 : index
    %1 = vector.load %arg1[%c0_1, %c0_2] : memref<16x128xf32, #tpu.memory_space<vmem>>, vector<16x128xf32>
    %cst = arith.constant dense<0.000000e+00> : vector<8x128xf32>
    %2 = tpu.matmul %0, %1, %cst {dimension_numbers = #tpu.dot_dimension_numbers<[1], [0], [0], [1], [0, 0, 1, 1], [], []>} : vector<8x16xf32>, vector<16x128xf32>, vector<8x128xf32> -> vector<8x128xf32>
    %c0_3 = arith.constant 0 : index
    %c0_4 = arith.constant 0 : index
    %3 = vector.load %arg2[%c0_3, %c0_4] : memref<1x128xf32, #tpu.memory_space<vmem>>, vector<1x128xf32>
    %4 = vector.broadcast %3 : vector<1x128xf32> to vector<8x128xf32>
    %5 = arith.addf %2, %4 : vector<8x128xf32>
    %cst_5 = arith.constant 0.000000e+00 : f32
    %6 = vector.broadcast %cst_5 : f32 to vector<8x128xf32>
    %7 = arith.maximumf %5, %6 : vector<8x128xf32>
    %c0_6 = arith.constant 0 : index
    %c0_7 = arith.constant 0 : index
    %8 = vector.load %arg3[%c0_6, %c0_7] : memref<128x128xf32, #tpu.memory_space<vmem>>, vector<128x128xf32>
    %cst_8 = arith.constant dense<0.000000e+00> : vector<8x128xf32>
    %9 = tpu.matmul %7, %8, %cst_8 {dimension_numbers = #tpu.dot_dimension_numbers<[1], [0], [0], [1], [0, 0, 1, 1], [], []>} : vector<8x128xf32>, vector<128x128xf32>, vector<8x128xf32> -> vector<8x128xf32>
    %c0_9 = arith.constant 0 : index
    %c0_10 = arith.constant 0 : index
    %10 = vector.load %arg4[%c0_9, %c0_10] : memref<1x128xf32, #tpu.memory_space<vmem>>, vector<1x128xf32>
    %11 = vector.broadcast %10 : vector<1x128xf32> to vector<8x128xf32>
    %12 = arith.addf %9, %11 : vector<8x128xf32>
    %cst_11 = arith.constant 0.000000e+00 : f32
    %13 = vector.broadcast %cst_11 : f32 to vector<8x128xf32>
    %14 = arith.maximumf %12, %13 : vector<8x128xf32>
    %c0_12 = arith.constant 0 : index
    %c0_13 = arith.constant 0 : index
    %15 = vector.load %arg5[%c0_12, %c0_13] : memref<128x128xf32, #tpu.memory_space<vmem>>, vector<128x128xf32>
    %cst_14 = arith.constant dense<0.000000e+00> : vector<8x128xf32>
    %16 = tpu.matmul %14, %15, %cst_14 {dimension_numbers = #tpu.dot_dimension_numbers<[1], [0], [0], [1], [0, 0, 1, 1], [], []>} : vector<8x128xf32>, vector<128x128xf32>, vector<8x128xf32> -> vector<8x128xf32>
    %c0_15 = arith.constant 0 : index
    %c0_16 = arith.constant 0 : index
    %17 = vector.load %arg6[%c0_15, %c0_16] : memref<1x128xf32, #tpu.memory_space<vmem>>, vector<1x128xf32>
    %18 = vector.broadcast %17 : vector<1x128xf32> to vector<8x128xf32>
    %19 = arith.addf %16, %18 : vector<8x128xf32>
    %cst_17 = arith.constant 0.000000e+00 : f32
    %20 = vector.broadcast %cst_17 : f32 to vector<8x128xf32>
    %21 = arith.maximumf %19, %20 : vector<8x128xf32>
    %c0_18 = arith.constant 0 : index
    %c0_19 = arith.constant 0 : index
    %22 = vector.load %arg7[%c0_18, %c0_19] : memref<128x128xf32, #tpu.memory_space<vmem>>, vector<128x128xf32>
    %cst_20 = arith.constant dense<0.000000e+00> : vector<8x128xf32>
    %23 = tpu.matmul %21, %22, %cst_20 {dimension_numbers = #tpu.dot_dimension_numbers<[1], [0], [0], [1], [0, 0, 1, 1], [], []>} : vector<8x128xf32>, vector<128x128xf32>, vector<8x128xf32> -> vector<8x128xf32>
    %c0_21 = arith.constant 0 : index
    %c0_22 = arith.constant 0 : index
    %24 = vector.load %arg8[%c0_21, %c0_22] : memref<1x128xf32, #tpu.memory_space<vmem>>, vector<1x128xf32>
    %25 = vector.broadcast %24 : vector<1x128xf32> to vector<8x128xf32>
    %26 = arith.addf %23, %25 : vector<8x128xf32>
    %27 = tpu.iota {dimensions = array<i32: 1>} : vector<8x128xi32>
    %28 = tpu.iota {dimensions = array<i32: 0>} : vector<8x128xi32>
    %c2_i32 = arith.constant 2 : i32
    %29 = vector.broadcast %c2_i32 : i32 to vector<8x128xi32>
    %30 = arith.cmpi slt, %28, %29 : vector<8x128xi32>
    %cst_23 = arith.constant 0xFF800000 : f32
    %31 = vector.broadcast %cst_23 : f32 to vector<8x128xf32>
    %32 = arith.select %30, %26, %31 : vector<8x128xi1>, vector<8x128xf32>
    %cst_24 = arith.constant dense<0xFF800000> : vector<128xf32>
    %33 = vector.multi_reduction <maximumf>, %32, %cst_24 [0] : vector<8x128xf32> to vector<128xf32>
    %34 = vector.shape_cast %33 : vector<128xf32> to vector<1x128xf32>
    %35 = vector.broadcast %34 : vector<1x128xf32> to vector<8x128xf32>
    %36 = arith.subf %32, %35 : vector<8x128xf32>
    %37 = math.exp %36 : vector<8x128xf32>
    %cst_25 = arith.constant dense<0.000000e+00> : vector<128xf32>
    %38 = vector.multi_reduction <add>, %37, %cst_25 [0] : vector<8x128xf32> to vector<128xf32>
    %39 = vector.shape_cast %38 : vector<128xf32> to vector<1x128xf32>
    %40 = vector.broadcast %39 : vector<1x128xf32> to vector<8x128xf32>
    %41 = arith.divf %37, %40 : vector<8x128xf32>
    %c4_i32 = arith.constant 4 : i32
    %42 = vector.broadcast %c4_i32 : i32 to vector<8x128xi32>
    %43 = arith.cmpi slt, %27, %42 : vector<8x128xi32>
    %c4_i32_26 = arith.constant 4 : i32
    %44 = vector.broadcast %c4_i32_26 : i32 to vector<8x128xi32>
    %45 = arith.cmpi eq, %27, %44 : vector<8x128xi32>
    %cst_27 = arith.constant 0.000000e+00 : f32
    %46 = vector.broadcast %cst_27 : f32 to vector<8x128xf32>
    %47 = arith.select %45, %26, %46 : vector<8x128xi1>, vector<8x128xf32>
    %48 = arith.select %43, %41, %47 : vector<8x128xi1>, vector<8x128xf32>
    %c0_28 = arith.constant 0 : index
    %c0_29 = arith.constant 0 : index
    %49 = vector.load %arg9[%c0_28, %c0_29] : memref<8x128xf32, #tpu.memory_space<vmem>>, vector<8x128xf32>
    tpu.vector_store %arg9[%c0_28, %c0_29], %48 {strides = array<i32>} : memref<8x128xf32, #tpu.memory_space<vmem>>, vector<8x128xf32>,
    return
  }
}

</mosaic_0001>

<llo_original>
// kernel: actor_critic_forward.1
$region0: #{actor_critic_forward.1}
  #allocation0 [shape = 'u32[]', space=smem, size = 0x4, offset = 0x4, fixed_abs, tag = 'smem constant byte address 0x4 - core index']
  #allocation1 [shape = 'u32[144,128]{1,0:T(1,128)}', space=vmem, size = 0x12000, scoped, tag = 'internal scratch']
  %s0 = inlined_call_operand.vmem [shape: f32[8,16], index: 0, kind: input, shape index: {}]
  %s1 = inlined_call_operand.vmem [shape: f32[16,128], index: 1, kind: input, shape index: {}]
  %s2 = inlined_call_operand.vmem [shape: f32[1,128], index: 2, kind: input, shape index: {}]
  %s3 = inlined_call_operand.hbm [shape: f32[128,128], index: 3, kind: input, shape index: {}]
  %s4 = inlined_call_operand.vmem [shape: f32[1,128], index: 4, kind: input, shape index: {}]
  %s5 = inlined_call_operand.hbm [shape: f32[128,128], index: 5, kind: input, shape index: {}]
  %s6 = inlined_call_operand.vmem [shape: f32[1,128], index: 6, kind: input, shape index: {}]
  %s7 = inlined_call_operand.hbm [shape: f32[128,128], index: 7, kind: input, shape index: {}]
  %s8 = inlined_call_operand.vmem [shape: f32[1,128], index: 8, kind: input, shape index: {}]
  %s9 = inlined_call_operand.vmem [shape: f32[8,128], index: 9, kind: output, shape index: {}]
  %s10 = sld [smem:[#allocation0]]
  $region58: #{actor_critic_forward.1} parent=0
    _
  %s12 = ssub.s32 1, %s10
  %s13 = scalar_select 0, %s12, %s10
  $region1: #{actor_critic_forward.1} parent=0
    #allocation2 [shape = 'u8[65536]{0}', space=vmem, size = 0x10000, scoped, tag = 'input window, operand 3, single buffered']
    #allocation3 [shape = 's32[1]{0}', space=sflag, size = 0x4, scoped, tag = 'scoped memory for actor_critic_forward.1']
    #allocation4 [shape = 'u8[65536]{0}', space=vmem, size = 0x10000, scoped, tag = 'input window, operand 5, single buffered']
    #allocation5 [shape = 's32[1]{0}', space=sflag, size = 0x4, scoped, tag = 'scoped memory for actor_critic_forward.1']
    #allocation6 [shape = 'u8[65536]{0}', space=vmem, size = 0x10000, scoped, tag = 'input window, operand 7, single buffered']
    %14 = vsyncpa [#allocation3], 0
    %15 = vsyncpa [#allocation5], 0
    // Predicated region
    $region2: #{actor_critic_forward.1} parent=1 // pred_check
      _
    $region3: #{actor_critic_forward.1} parent=1 // pred_check_branch
      %17 = sbr.rel (0) target = $region5
    $region4: #{actor_critic_forward.1} parent=1 // pred_region
      _
    $region5: #{actor_critic_forward.1} parent=1 // pred_fallthru
      _
    // Predicated region
    $region6: #{actor_critic_forward.1} parent=1 // pred_check
      _
    $region7: #{actor_critic_forward.1} parent=1 // pred_check_branch
      %19 = sbr.rel (0) target = $region9
    $region8: #{actor_critic_forward.1} parent=1 // pred_region
      _
    $region9: #{actor_critic_forward.1} parent=1 // pred_fallthru
      _
    // Predicated region
    $region10: #{actor_critic_forward.1} parent=1 // pred_check
      _
    $region11: #{actor_critic_forward.1} parent=1 // pred_check_branch
      %21 = sbr.rel (0) target = $region13
    $region12: #{actor_critic_forward.1} parent=1 // pred_region
      _
    $region13: #{actor_critic_forward.1} parent=1 // pred_fallthru
      _
    // Predicated region
    $region14: #{actor_critic_forward.1} parent=1 // pred_check
      _
    $region15: #{actor_critic_forward.1} parent=1 // pred_check_branch
      %23 = sbr.rel (0) target = $region17
    $region16: #{actor_critic_forward.1} parent=1 // pred_region
      %s25 = ssub.s32 2048, 2048
      %26 = vsyncadd [#allocation3], %s25
      %s27 = sshll.u32 [#allocation2], 4
      %s28 = int_to_ptr.vmem [resolvable:$true] %s27
      %33 = dma.hbm_to_vmem [thread:$0]  %s3, 2048, %s28, [#allocation3], 128, 128, 8
    $region17: #{actor_critic_forward.1} parent=1 // pred_fallthru
      _
    // Predicated region
    $region18: #{actor_critic_forward.1} parent=1 // pred_check
      _
    $region19: #{actor_critic_forward.1} parent=1 // pred_check_branch
      %35 = sbr.rel (0) target = $region21
    $region20: #{actor_critic_forward.1} parent=1 // pred_region
      _
    $region21: #{actor_critic_forward.1} parent=1 // pred_fallthru
      _
    // Predicated region
    $region22: #{actor_critic_forward.1} parent=1 // pred_check
      _
    $region23: #{actor_critic_forward.1} parent=1 // pred_check_branch
      %37 = sbr.rel (0) target = $region25
    $region24: #{actor_critic_forward.1} parent=1 // pred_region
      %s39 = ssub.s32 2048, 2048
      %40 = vsyncadd [#allocation5], %s39
      %s41 = sshll.u32 [#allocation4], 4
      %s42 = int_to_ptr.vmem [resolvable:$true] %s41
      %47 = dma.hbm_to_vmem [thread:$0]  %s5, 2048, %s42, [#allocation5], 128, 128, 8
    $region25: #{actor_critic_forward.1} parent=1 // pred_fallthru
      _
    // Predicated region
    $region26: #{actor_critic_forward.1} parent=1 // pred_check
      _
    $region27: #{actor_critic_forward.1} parent=1 // pred_check_branch
      %49 = sbr.rel (0) target = $region29
    $region28: #{actor_critic_forward.1} parent=1 // pred_region
      _
    $region29: #{actor_critic_forward.1} parent=1 // pred_fallthru
      _
    // Predicated region
    $region30: #{actor_critic_forward.1} parent=1 // pred_check
      _
    $region31: #{actor_critic_forward.1} parent=1 // pred_check_branch
      %51 = sbr.rel (0) target = $region33
    $region32: #{actor_critic_forward.1} parent=1 // pred_region
      %s53 = ssub.s32 2048, 2048
      %54 = vsyncadd [#allocation5], %s53
      %s55 = sshll.u32 [#allocation6], 4
      %s56 = int_to_ptr.vmem [resolvable:$true] %s55
      %61 = dma.hbm_to_vmem [thread:$0]  %s7, 2048, %s56, [#allocation5], 128, 128, 8
    $region33: #{actor_critic_forward.1} parent=1 // pred_fallthru
      _
    // Predicated region
    $region34: #{actor_critic_forward.1} parent=1 // pred_check
      _
    $region35: #{actor_critic_forward.1} parent=1 // pred_check_branch
      %63 = sbr.rel (0) target = $region37
    $region36: #{actor_critic_forward.1} parent=1 // pred_region
      _
    $region37: #{actor_critic_forward.1} parent=1 // pred_fallthru
      _
    // Predicated region
    $region38: #{actor_critic_forward.1} parent=1 // pred_check
      _
    $region39: #{actor_critic_forward.1} parent=1 // pred_check_branch
      %65 = sbr.rel (0) target = $region41
    $region40: #{actor_critic_forward.1} parent=1 // pred_region
      %66 = dma.done [#allocation3], 2048
    $region41: #{actor_critic_forward.1} parent=1 // pred_fallthru
      _
    // Predicated region
    $region42: #{actor_critic_forward.1} parent=1 // pred_check
      _
    $region43: #{actor_critic_forward.1} parent=1 // pred_check_branch
      %68 = sbr.rel (0) target = $region45
    $region44: #{actor_critic_forward.1} parent=1 // pred_region
      %69 = dma.done [#allocation5], 2048
    $region45: #{actor_critic_forward.1} parent=1 // pred_fallthru
      _
    // Predicated region
    $region46: #{actor_critic_forward.1} parent=1 // pred_check
      _
    $region47: #{actor_critic_forward.1} parent=1 // pred_check_branch
      %71 = sbr.rel (0) target = $region49
    $region48: #{actor_critic_forward.1} parent=1 // pred_region
      %72 = dma.done [#allocation5], 2048
    $region49: #{actor_critic_forward.1} parent=1 // pred_fallthru
      _
    %v73 = vld [vmem:[%s0] sm:$0xff]
    %v74 = vld [vmem:[%s1] sm:$0xff]
    %v75 = vld [vmem:[%s1 + $0x8] sm:$0xff]
    %v76 = vld [vmem:[%s2] sm:$0x1]
    %v78 = vlaneseq
    %v79 = vshrl.u32 %v78, 7
    %v80 = vsub.s32 0, %v79
    %v81 = vrot.slane %v76, %v80
    %vm83 = vcmask 130048
    %v85 = vsel %vm83, %v73, 0
    %87 = vmatprep.subr.mxu0 0.0
    %88 = vmatpush1.msra.mxu0 %v74
    %89 = vmatprep.subr.mxu0 0.0
    %90 = vmatpush1.msra.mxu0 %v75
    %91 = vmatprep.subr.mxu0 0.0
    %92 = vmatpush1.msra.mxu0 0.0
    %93 = vmatprep.subr.mxu0 0.0
    %94 = vmatpush1.msra.mxu0 0.0
    %95 = vmatprep.subr.mxu0 0.0
    %96 = vmatpush1.msra.mxu0 0.0
    %97 = vmatprep.subr.mxu0 0.0
    %98 = vmatpush1.msra.mxu0 0.0
    %99 = vmatprep.subr.mxu0 0.0
    %100 = vmatpush1.msra.mxu0 0.0
    %101 = vmatprep.subr.mxu0 0.0
    %102 = vmatpush1.msra.mxu0 0.0
    %103 = vmatprep.subr.mxu0 0.0
    %104 = vmatpush1.msra.mxu0 0.0
    %105 = vmatprep.subr.mxu0 0.0
    %106 = vmatpush1.msra.mxu0 0.0
    %107 = vmatprep.subr.mxu0 0.0
    %108 = vmatpush1.msra.mxu0 0.0
    %109 = vmatprep.subr.mxu0 0.0
    %110 = vmatpush1.msra.mxu0 0.0
    %111 = vmatprep.subr.mxu0 0.0
    %112 = vmatpush1.msra.mxu0 0.0
    %113 = vmatprep.subr.mxu0 0.0
    %114 = vmatpush1.msra.mxu0 0.0
    %115 = vmatprep.subr.mxu0 0.0
    %116 = vmatpush1.msra.mxu0 0.0
    %117 = vmatprep.subr.mxu0 0.0
    %118 = vmatpush1.msra.mxu0 0.0
    %119 = vmatprep.subr.mxu0 0.0
    %120 = vmatpush1.msra.mxu0 0.0
    %121 = vmatprep.subr.mxu0 0.0
    %122 = vmatpush1.msra.mxu0 0.0
    %123 = vmatprep.subr.mxu0 0.0
    %124 = vmatpush1.msra.mxu0 0.0
    %125 = vmatprep.subr.mxu0 0.0
    %126 = vmatpush1.msra.mxu0 0.0
    %127 = vmatprep.subr.mxu0 0.0
    %128 = vmatpush1.msra.mxu0 0.0
    %129 = vmatprep.subr.mxu0 0.0
    %130 = vmatpush1.msra.mxu0 0.0
    %131 = vmatprep.subr.mxu0 0.0
    %132 = vmatpush1.msra.mxu0 0.0
    %133 = vmatprep.subr.mxu0 0.0
    %134 = vmatpush1.msra.mxu0 0.0
    %135 = vmatprep.subr.mxu0 0.0
    %136 = vmatpush1.msra.mxu0 0.0
    %137 = vmatprep.subr.mxu0 0.0
    %138 = vmatpush1.msra.mxu0 0.0
    %139 = vmatprep.subr.mxu0 0.0
    %140 = vmatpush1.msra.mxu0 0.0
    %141 = vmatprep.subr.mxu0 0.0
    %142 = vmatpush1.msra.mxu0 0.0
    %143 = vmatprep.subr.mxu0 0.0
    %144 = vmatpush1.msra.mxu0 0.0
    %145 = vmatprep.subr.mxu0 0.0
    %146 = vmatpush1.msra.mxu0 0.0
    %147 = vmatprep.subr.mxu0 0.0
    %148 = vmatpush1.msra.mxu0 0.0
    %149 = vmatprep.subr.mxu0 0.0
    %150 = vmatpush1.msra.mxu0 0.0
    %151 = vmatprep.mubr.f32.mxu0 0.0
    %152 = vmatmul.mubr.f32.gmra.mrb[0].mxu0 %v85
    %v153 = vpop.f32.mrb[0].mxu0
    %v154 = vadd.f32 %v81, %v153
    %v155 = vpop.f32.mrb[0].mxu0
    %156 = vdwg.mxu0
    %v157 = vmax.f32 %v154, 0.0
    %v158 = vld [vmem:[#allocation2] sm:$0xff]
    %v159 = vld [vmem:[#allocation2 + $0x8] sm:$0xff]
    %v160 = vld [vmem:[#allocation2 + $0x10] sm:$0xff]
    %v161 = vld [vmem:[#allocation2 + $0x18] sm:$0xff]
    %v162 = vld [vmem:[#allocation2 + $0x20] sm:$0xff]
    %v163 = vld [vmem:[#allocation2 + $0x28] sm:$0xff]
    %v164 = vld [vmem:[#allocation2 + $0x30] sm:$0xff]
    %v165 = vld [vmem:[#allocation2 + $0x38] sm:$0xff]
    %v166 = vld [vmem:[#allocation2 + $0x40] sm:$0xff]
    %v167 = vld [vmem:[#allocation2 + $0x48] sm:$0xff]
    %v168 = vld [vmem:[#allocation2 + $0x50] sm:$0xff]
    %v169 = vld [vmem:[#allocation2 + $0x58] sm:$0xff]
    %v170 = vld [vmem:[#allocation2 + $0x60] sm:$0xff]
    %v171 = vld [vmem:[#allocation2 + $0x68] sm:$0xff]
    %v172 = vld [vmem:[#allocation2 + $0x70] sm:$0xff]
    %v173 = vld [vmem:[#allocation2 + $0x78] sm:$0xff]
    %v174 = vld [vmem:[%s4] sm:$0x1]
    %v176 = vlaneseq
    %v177 = vshrl.u32 %v176, 7
    %v178 = vsub.s32 0, %v177
    %v179 = vrot.slane %v174, %v178
    %181 = vmatprep.subr.mxu0 0.0
    %182 = vmatpush1.msra.mxu0 %v158
    %183 = vmatprep.subr.mxu0 0.0
    %184 = vmatpush1.msra.mxu0 %v159
    %185 = vmatprep.subr.mxu0 0.0
    %186 = vmatpush1.msra.mxu0 %v160
    %187 = vmatprep.subr.mxu0 0.0
    %188 = vmatpush1.msra.mxu0 %v161
    %189 = vmatprep.subr.mxu0 0.0
    %190 = vmatpush1.msra.mxu0 %v162
    %191 = vmatprep.subr.mxu0 0.0
    %192 = vmatpush1.msra.mxu0 %v163
    %193 = vmatprep.subr.mxu0 0.0
    %194 = vmatpush1.msra.mxu0 %v164
    %195 = vmatprep.subr.mxu0 0.0
    %196 = vmatpush1.msra.mxu0 %v165
    %197 = vmatprep.subr.mxu0 0.0
    %198 = vmatpush1.msra.mxu0 %v166
    %199 = vmatprep.subr.mxu0 0.0
    %200 = vmatpush1.msra.mxu0 %v167
    %201 = vmatprep.subr.mxu0 0.0
    %202 = vmatpush1.msra.mxu0 %v168
    %203 = vmatprep.subr.mxu0 0.0
    %204 = vmatpush1.msra.mxu0 %v169
    %205 = vmatprep.subr.mxu0 0.0
    %206 = vmatpush1.msra.mxu0 %v170
    %207 = vmatprep.subr.mxu0 0.0
    %208 = vmatpush1.msra.mxu0 %v171
    %209 = vmatprep.subr.mxu0 0.0
    %210 = vmatpush1.msra.mxu0 %v172
    %211 = vmatprep.subr.mxu0 0.0
    %212 = vmatpush1.msra.mxu0 %v173
    %213 = vmatprep.subr.mxu0 0.0
    %214 = vmatpush1.msra.mxu0 0.0
    %215 = vmatprep.subr.mxu0 0.0
    %216 = vmatpush1.msra.mxu0 0.0
    %217 = vmatprep.subr.mxu0 0.0
    %218 = vmatpush1.msra.mxu0 0.0
    %219 = vmatprep.subr.mxu0 0.0
    %220 = vmatpush1.msra.mxu0 0.0
    %221 = vmatprep.subr.mxu0 0.0
    %222 = vmatpush1.msra.mxu0 0.0
    %223 = vmatprep.subr.mxu0 0.0
    %224 = vmatpush1.msra.mxu0 0.0
    %225 = vmatprep.subr.mxu0 0.0
    %226 = vmatpush1.msra.mxu0 0.0
    %227 = vmatprep.subr.mxu0 0.0
    %228 = vmatpush1.msra.mxu0 0.0
    %229 = vmatprep.subr.mxu0 0.0
    %230 = vmatpush1.msra.mxu0 0.0
    %231 = vmatprep.subr.mxu0 0.0
    %232 = vmatpush1.msra.mxu0 0.0
    %233 = vmatprep.subr.mxu0 0.0
    %234 = vmatpush1.msra.mxu0 0.0
    %235 = vmatprep.subr.mxu0 0.0
    %236 = vmatpush1.msra.mxu0 0.0
    %237 = vmatprep.subr.mxu0 0.0
    %238 = vmatpush1.msra.mxu0 0.0
    %239 = vmatprep.subr.mxu0 0.0
    %240 = vmatpush1.msra.mxu0 0.0
    %241 = vmatprep.subr.mxu0 0.0
    %242 = vmatpush1.msra.mxu0 0.0
    %243 = vmatprep.subr.mxu0 0.0
    %244 = vmatpush1.msra.mxu0 0.0
    %245 = vmatprep.mubr.f32.mxu0 0.0
    %246 = vmatmul.mubr.f32.gmra.mrb[0].mxu0 %v157
    %v247 = vpop.f32.mrb[0].mxu0
    %v248 = vadd.f32 %v179, %v247
    %v249 = vpop.f32.mrb[0].mxu0
    %250 = vdwg.mxu0
    %v251 = vmax.f32 %v248, 0.0
    %v252 = vld [vmem:[#allocation4] sm:$0xff]
    %v253 = vld [vmem:[#allocation4 + $0x8] sm:$0xff]
    %v254 = vld [vmem:[#allocation4 + $0x10] sm:$0xff]
    %v255 = vld [vmem:[#allocation4 + $0x18] sm:$0xff]
    %v256 = vld [vmem:[#allocation4 + $0x20] sm:$0xff]
    %v257 = vld [vmem:[#allocation4 + $0x28] sm:$0xff]
    %v258 = vld [vmem:[#allocation4 + $0x30] sm:$0xff]
    %v259 = vld [vmem:[#allocation4 + $0x38] sm:$0xff]
    %v260 = vld [vmem:[#allocation4 + $0x40] sm:$0xff]
    %v261 = vld [vmem:[#allocation4 + $0x48] sm:$0xff]
    %v262 = vld [vmem:[#allocation4 + $0x50] sm:$0xff]
    %v263 = vld [vmem:[#allocation4 + $0x58] sm:$0xff]
    %v264 = vld [vmem:[#allocation4 + $0x60] sm:$0xff]
    %v265 = vld [vmem:[#allocation4 + $0x68] sm:$0xff]
    %v266 = vld [vmem:[#allocation4 + $0x70] sm:$0xff]
    %v267 = vld [vmem:[#allocation4 + $0x78] sm:$0xff]
    %v268 = vld [vmem:[%s6] sm:$0x1]
    %v270 = vlaneseq
    %v271 = vshrl.u32 %v270, 7
    %v272 = vsub.s32 0, %v271
    %v273 = vrot.slane %v268, %v272
    %275 = vmatprep.subr.mxu0 0.0
    %276 = vmatpush1.msra.mxu0 %v252
    %277 = vmatprep.subr.mxu0 0.0
    %278 = vmatpush1.msra.mxu0 %v253
    %279 = vmatprep.subr.mxu0 0.0
    %280 = vmatpush1.msra.mxu0 %v254
    %281 = vmatprep.subr.mxu0 0.0
    %282 = vmatpush1.msra.mxu0 %v255
    %283 = vmatprep.subr.mxu0 0.0
    %284 = vmatpush1.msra.mxu0 %v256
    %285 = vmatprep.subr.mxu0 0.0
    %286 = vmatpush1.msra.mxu0 %v257
    %287 = vmatprep.subr.mxu0 0.0
    %288 = vmatpush1.msra.mxu0 %v258
    %289 = vmatprep.subr.mxu0 0.0
    %290 = vmatpush1.msra.mxu0 %v259
    %291 = vmatprep.subr.mxu0 0.0
    %292 = vmatpush1.msra.mxu0 %v260
    %293 = vmatprep.subr.mxu0 0.0
    %294 = vmatpush1.msra.mxu0 %v261
    %295 = vmatprep.subr.mxu0 0.0
    %296 = vmatpush1.msra.mxu0 %v262
    %297 = vmatprep.subr.mxu0 0.0
    %298 = vmatpush1.msra.mxu0 %v263
    %299 = vmatprep.subr.mxu0 0.0
    %300 = vmatpush1.msra.mxu0 %v264
    %301 = vmatprep.subr.mxu0 0.0
    %302 = vmatpush1.msra.mxu0 %v265
    %303 = vmatprep.subr.mxu0 0.0
    %304 = vmatpush1.msra.mxu0 %v266
    %305 = vmatprep.subr.mxu0 0.0
    %306 = vmatpush1.msra.mxu0 %v267
    %307 = vmatprep.subr.mxu0 0.0
    %308 = vmatpush1.msra.mxu0 0.0
    %309 = vmatprep.subr.mxu0 0.0
    %310 = vmatpush1.msra.mxu0 0.0
    %311 = vmatprep.subr.mxu0 0.0
    %312 = vmatpush1.msra.mxu0 0.0
    %313 = vmatprep.subr.mxu0 0.0
    %314 = vmatpush1.msra.mxu0 0.0
    %315 = vmatprep.subr.mxu0 0.0
    %316 = vmatpush1.msra.mxu0 0.0
    %317 = vmatprep.subr.mxu0 0.0
    %318 = vmatpush1.msra.mxu0 0.0
    %319 = vmatprep.subr.mxu0 0.0
    %320 = vmatpush1.msra.mxu0 0.0
    %321 = vmatprep.subr.mxu0 0.0
    %322 = vmatpush1.msra.mxu0 0.0
    %323 = vmatprep.subr.mxu0 0.0
    %324 = vmatpush1.msra.mxu0 0.0
    %325 = vmatprep.subr.mxu0 0.0
    %326 = vmatpush1.msra.mxu0 0.0
    %327 = vmatprep.subr.mxu0 0.0
    %328 = vmatpush1.msra.mxu0 0.0
    %329 = vmatprep.subr.mxu0 0.0
    %330 = vmatpush1.msra.mxu0 0.0
    %331 = vmatprep.subr.mxu0 0.0
    %332 = vmatpush1.msra.mxu0 0.0
    %333 = vmatprep.subr.mxu0 0.0
    %334 = vmatpush1.msra.mxu0 0.0
    %335 = vmatprep.subr.mxu0 0.0
    %336 = vmatpush1.msra.mxu0 0.0
    %337 = vmatprep.subr.mxu0 0.0
    %338 = vmatpush1.msra.mxu0 0.0
    %339 = vmatprep.mubr.f32.mxu0 0.0
    %340 = vmatmul.mubr.f32.gmra.mrb[0].mxu0 %v251
    %v341 = vpop.f32.mrb[0].mxu0
    %v342 = vadd.f32 %v273, %v341
    %v343 = vpop.f32.mrb[0].mxu0
    %344 = vdwg.mxu0
    %v345 = vmax.f32 %v342, 0.0
    %v346 = vld [vmem:[#allocation6] sm:$0xff]
    %v347 = vld [vmem:[#allocation6 + $0x8] sm:$0xff]
    %v348 = vld [vmem:[#allocation6 + $0x10] sm:$0xff]
    %v349 = vld [vmem:[#allocation6 + $0x18] sm:$0xff]
    %v350 = vld [vmem:[#allocation6 + $0x20] sm:$0xff]
    %v351 = vld [vmem:[#allocation6 + $0x28] sm:$0xff]
    %v352 = vld [vmem:[#allocation6 + $0x30] sm:$0xff]
    %v353 = vld [vmem:[#allocation6 + $0x38] sm:$0xff]
    %v354 = vld [vmem:[#allocation6 + $0x40] sm:$0xff]
    %v355 = vld [vmem:[#allocation6 + $0x48] sm:$0xff]
    %v356 = vld [vmem:[#allocation6 + $0x50] sm:$0xff]
    %v357 = vld [vmem:[#allocation6 + $0x58] sm:$0xff]
    %v358 = vld [vmem:[#allocation6 + $0x60] sm:$0xff]
    %v359 = vld [vmem:[#allocation6 + $0x68] sm:$0xff]
    %v360 = vld [vmem:[#allocation6 + $0x70] sm:$0xff]
    %v361 = vld [vmem:[#allocation6 + $0x78] sm:$0xff]
    %v362 = vld [vmem:[%s8] sm:$0x1]
    %v364 = vlaneseq
    %v365 = vshrl.u32 %v364, 7
    %v366 = vsub.s32 0, %v365
    %v367 = vrot.slane %v362, %v366
    %369 = vmatprep.subr.mxu0 0.0
    %370 = vmatpush1.msra.mxu0 %v346
    %371 = vmatprep.subr.mxu0 0.0
    %372 = vmatpush1.msra.mxu0 %v347
    %373 = vmatprep.subr.mxu0 0.0
    %374 = vmatpush1.msra.mxu0 %v348
    %375 = vmatprep.subr.mxu0 0.0
    %376 = vmatpush1.msra.mxu0 %v349
    %377 = vmatprep.subr.mxu0 0.0
    %378 = vmatpush1.msra.mxu0 %v350
    %379 = vmatprep.subr.mxu0 0.0
    %380 = vmatpush1.msra.mxu0 %v351
    %381 = vmatprep.subr.mxu0 0.0
    %382 = vmatpush1.msra.mxu0 %v352
    %383 = vmatprep.subr.mxu0 0.0
    %384 = vmatpush1.msra.mxu0 %v353
    %385 = vmatprep.subr.mxu0 0.0
    %386 = vmatpush1.msra.mxu0 %v354
    %387 = vmatprep.subr.mxu0 0.0
    %388 = vmatpush1.msra.mxu0 %v355
    %389 = vmatprep.subr.mxu0 0.0
    %390 = vmatpush1.msra.mxu0 %v356
    %391 = vmatprep.subr.mxu0 0.0
    %392 = vmatpush1.msra.mxu0 %v357
    %393 = vmatprep.subr.mxu0 0.0
    %394 = vmatpush1.msra.mxu0 %v358
    %395 = vmatprep.subr.mxu0 0.0
    %396 = vmatpush1.msra.mxu0 %v359
    %397 = vmatprep.subr.mxu0 0.0
    %398 = vmatpush1.msra.mxu0 %v360
    %399 = vmatprep.subr.mxu0 0.0
    %400 = vmatpush1.msra.mxu0 %v361
    %401 = vmatprep.subr.mxu0 0.0
    %402 = vmatpush1.msra.mxu0 0.0
    %403 = vmatprep.subr.mxu0 0.0
    %404 = vmatpush1.msra.mxu0 0.0
    %405 = vmatprep.subr.mxu0 0.0
    %406 = vmatpush1.msra.mxu0 0.0
    %407 = vmatprep.subr.mxu0 0.0
    %408 = vmatpush1.msra.mxu0 0.0
    %409 = vmatprep.subr.mxu0 0.0
    %410 = vmatpush1.msra.mxu0 0.0
    %411 = vmatprep.subr.mxu0 0.0
    %412 = vmatpush1.msra.mxu0 0.0
    %413 = vmatprep.subr.mxu0 0.0
    %414 = vmatpush1.msra.mxu0 0.0
    %415 = vmatprep.subr.mxu0 0.0
    %416 = vmatpush1.msra.mxu0 0.0
    %417 = vmatprep.subr.mxu0 0.0
    %418 = vmatpush1.msra.mxu0 0.0
    %419 = vmatprep.subr.mxu0 0.0
    %420 = vmatpush1.msra.mxu0 0.0
    %421 = vmatprep.subr.mxu0 0.0
    %422 = vmatpush1.msra.mxu0 0.0
    %423 = vmatprep.subr.mxu0 0.0
    %424 = vmatpush1.msra.mxu0 0.0
    %425 = vmatprep.subr.mxu0 0.0
    %426 = vmatpush1.msra.mxu0 0.0
    %427 = vmatprep.subr.mxu0 0.0
    %428 = vmatpush1.msra.mxu0 0.0
    %429 = vmatprep.subr.mxu0 0.0
    %430 = vmatpush1.msra.mxu0 0.0
    %431 = vmatprep.subr.mxu0 0.0
    %432 = vmatpush1.msra.mxu0 0.0
    %433 = vmatprep.mubr.f32.mxu0 0.0
    %434 = vmatmul.mubr.f32.gmra.mrb[0].mxu0 %v345
    %v435 = vpop.f32.mrb[0].mxu0
    %v436 = vadd.f32 %v367, %v435
    %v437 = vpop.f32.mrb[0].mxu0
    %438 = vdwg.mxu0
    %v439 = vlaneseq
    %v440 = vand.u32 %v439, 127
    %v441 = vlaneseq
    %v442 = vshrl.u32 %v441, 7
    %vm443 = vcmp.lt.s32.totalorder %v442, 2
    %v444 = vsel %vm443, %v436, -inf
    %v445 = vrot.slane %v444, 4
    %v446 = vmax.f32 %v444, %v445
    %v447 = vrot.slane %v446, 2
    %v448 = vmax.f32 %v446, %v447
    %v449 = vrot.slane %v448, 1
    %v450 = vmax.f32 %v448, %v449
    %v451 = vsub.f32 %v444, %v450
    %v452 = vmul.f32 %v451, 1.442695
    %v453 = vpow.pop %v452
    %v454 = vrot.slane %v453, 4
    %v455 = vadd.f32 %v453, %v454
    %v456 = vrot.slane %v455, 2
    %v457 = vadd.f32 %v455, %v456
    %v458 = vrot.slane %v457, 1
    %v459 = vadd.f32 %v457, %v458
    %v460 = vrcp.pop %v459
    %v461 = vmul.f32 %v453, %v460
    %vm462 = vcmp.lt.s32.totalorder %v440, 4
    %vm463 = vcmp.eq.s32.totalorder %v440, 4
    %v464 = vsel %vm463, %v436, 0.0
    %v465 = vsel %vm462, %v461, %v464
    %466 = vst [vmem:[%s9] sm:$0xff] %v465
    // Predicated region
    $region50: #{actor_critic_forward.1} parent=1 // pred_check
      _
    $region51: #{actor_critic_forward.1} parent=1 // pred_check_branch
      %468 = sbr.rel (0) target = $region53
    $region52: #{actor_critic_forward.1} parent=1 // pred_region
      _
    $region53: #{actor_critic_forward.1} parent=1 // pred_fallthru
      _
    // Predicated region
    $region54: #{actor_critic_forward.1} parent=1 // pred_check
      _
    $region55: #{actor_critic_forward.1} parent=1 // pred_check_branch
      %470 = sbr.rel (0) target = $region57
    $region56: #{actor_critic_forward.1} parent=1 // pred_region
      _
    $region57: #{actor_critic_forward.1} parent=1 // pred_fallthru
      _
    %471 = vsyncpa [#allocation3], 1
    %472 = vsyncpa [#allocation5], 1

</llo_original>
